<compile_context>
chip_gen: v7x
topology: tpu7x:2x2x1
jax: 0.10.0
libtpu: 0.0.40
codegen_flags: <defaults>
</compile_context>

<pallas_src>
import functools

import jax
import jax.numpy as jnp
from jax.experimental import pallas as pl
from jax.experimental.pallas import tpu as pltpu

# Logical (unpadded) layer sizes of Server_Net's FC stack.
_IN = 16 * 5 * 5          # 400
_H1 = 120
_H2 = 84
_OUT = 10
_PAD = 128                # lane-dense padded width for all output-feature dims


def _mlp_kernel(x_ref, w1_ref, b1_ref, w2_ref, b2_ref, w3_ref, b3_ref, o_ref):
    # Weights arrive as bf16 (halved DMA bytes); cast to f32 in VMEM so the
    # dots and the epilogue run in f32 (matches the f32 reference exactly,
    # keeps the VPU math in f32 which is the fast path on v5e).
    x = x_ref[...]

    # fc1 + relu  -> (tb, 128) lane-dense
    h1 = jnp.dot(x, w1_ref[...].astype(jnp.float32),
                 preferred_element_type=jnp.float32)
    h1 = jnp.maximum(h1 + b1_ref[...], 0.0)

    # fc2 + relu  -> (tb, 128)
    h2 = jnp.dot(h1, w2_ref[...].astype(jnp.float32),
                 preferred_element_type=jnp.float32)
    h2 = jnp.maximum(h2 + b2_ref[...], 0.0)

    # fc3 (no activation) -> (tb, 128); cols >= 10 are exactly zero.
    out = jnp.dot(h2, w3_ref[...].astype(jnp.float32),
                  preferred_element_type=jnp.float32)
    o_ref[...] = (out + b3_ref[...]).astype(o_ref.dtype)


def _round_up(v, m):
    return (v + m - 1) // m * m


@functools.partial(jax.jit, static_argnames=())
def server_net_forward(x, params):
    """x: any shape (B, ...) whose trailing dims flatten to 400 features.

    params: padded/quantized params from init_params() —
      w1 (400,128) bf16, b1 (1,128) f32,
      w2 (128,128) bf16, b2 (1,128) f32,
      w3 (128,128) bf16, b3 (1,128) f32.
    Returns (B, 10) float32 logits.
    """
    b = x.shape[0]
    x2d = x.reshape(b, -1).astype(jnp.float32)   # view(-1, num_flat_features(x))
    assert x2d.shape[1] == _IN, "fc1 expects 400 input features (16*5*5)"

    w1, b1, w2, b2, w3, b3 = params

    # Batch tiling: tile of up to 512 rows (multiple of 8 sublanes), weights
    # resident across all grid steps.  512x400 f32 x-tile + 512x128 temps is
    # well under v7x's 32 MiB scoped VMEM limit even double-buffered.
    tb = min(512, _round_up(b, 8))
    b_pad = _round_up(b, tb)
    if b_pad != b:
        x2d = jnp.pad(x2d, ((0, b_pad - b), (0, 0)))
    grid = (b_pad // tb,)

    resident = lambda a: pl.BlockSpec(a.shape, lambda i: (0,) * a.ndim)

    flops = 2 * b_pad * (_IN * _PAD + _PAD * _PAD + _PAD * _PAD)
    bytes_accessed = (
        b_pad * _IN * 4                      # x (f32)
        + (_IN * _PAD + 2 * _PAD * _PAD) * 2  # weights (bf16)
        + 3 * _PAD * 4                       # biases (f32)
        + b_pad * _PAD * 4                   # padded output (f32)
    )

    out_padded = pl.pallas_call(
        _mlp_kernel,
        out_shape=jax.ShapeDtypeStruct((b_pad, _PAD), jnp.float32),
        grid=grid,
        in_specs=[
            pl.BlockSpec((tb, _IN), lambda i: (i, 0)),   # x: tiled over batch
            resident(w1), resident(b1),
            resident(w2), resident(b2),
            resident(w3), resident(b3),
        ],
        out_specs=pl.BlockSpec((tb, _PAD), lambda i: (i, 0)),
        compiler_params=pltpu.CompilerParams(
            dimension_semantics=("parallel",)),
        cost_estimate=pl.CostEstimate(
            flops=flops, transcendentals=0, bytes_accessed=bytes_accessed),
    )(x2d, w1, b1, w2, b2, w3, b3)

    return out_padded[:b, :_OUT]


def init_params(key):
    """Init mimicking nn.Linear's U(-1/sqrt(fan_in), 1/sqrt(fan_in)).

    Weights are zero-padded to lane-dense shapes and stored as bf16 (done once
    here, not per call); biases stay f32 (padded with zeros).
    """
    def linear(k, fan_in, fan_out, pad_in, pad_out):
        kw, kb = jax.random.split(k)
        bound = 1.0 / jnp.sqrt(float(fan_in))
        w = jax.random.uniform(kw, (fan_in, fan_out), jnp.float32, -bound, bound)
        bvec = jax.random.uniform(kb, (1, fan_out), jnp.float32, -bound, bound)
        w_p = jnp.zeros((pad_in, pad_out), jnp.float32).at[:fan_in, :fan_out].set(w)
        b_p = jnp.zeros((1, pad_out), jnp.float32).at[:, :fan_out].set(bvec)
        return w_p.astype(jnp.bfloat16), b_p

    k1, k2, k3 = jax.random.split(key, 3)
    w1, b1 = linear(k1, _IN, _H1, _IN, _PAD)     # (400,128) bf16, (1,128) f32
    w2, b2 = linear(k2, _H1, _H2, _PAD, _PAD)    # (128,128) bf16, (1,128) f32
    w3, b3 = linear(k3, _H2, _OUT, _PAD, _PAD)   # (128,128) bf16, (1,128) f32
    return (w1, b1, w2, b2, w3, b3)


def reference_forward(x, params):
    """Pure-JAX reference using the same (padded, bf16-quantized) params."""
    w1, b1, w2, b2, w3, b3 = params
    h = x.reshape(x.shape[0], -1).astype(jnp.float32)
    h = jnp.maximum(h @ w1.astype(jnp.float32) + b1, 0.0)
    h = jnp.maximum(h @ w2.astype(jnp.float32) + b2, 0.0)
    h = h @ w3.astype(jnp.float32) + b3
    return h[:, :_OUT]


# TODO(synk): conv1/conv2/max_pool path (Server_Net.test) is not part of
# forward() and is not implemented here.

if __name__ == "__main__":
    key = jax.random.PRNGKey(0)
    kp, kx = jax.random.split(key)

    params = init_params(kp)
    # forward() expects flattenable input of 400 features per example, e.g.
    # the post-conv feature-map shape (B, 16, 5, 5).
    x = jax.random.normal(kx, (8, 16, 5, 5), jnp.float32)

    out = server_net_forward(x, params)
    out = jax.block_until_ready(out)

    ref = reference_forward(x, params)
    assert out.shape == (8, 10), out.shape
    assert jnp.allclose(out, ref, atol=1e-4, rtol=1e-4), "mismatch vs reference"

    print("KERNEL_OK")
</pallas_src>

<mosaic_0001>
module attributes {stable_mosaic.version = 11 : i64} {
  func.func @_mlp_kernel(%arg0: i32, %arg1: memref<8x400xf32, #tpu.memory_space<vmem>>, %arg2: memref<400x128xbf16, #tpu.memory_space<vmem>>, %arg3: memref<1x128xf32, #tpu.memory_space<vmem>>, %arg4: memref<128x128xbf16, #tpu.memory_space<vmem>>, %arg5: memref<1x128xf32, #tpu.memory_space<vmem>>, %arg6: memref<128x128xbf16, #tpu.memory_space<vmem>>, %arg7: memref<1x128xf32, #tpu.memory_space<vmem>>, %arg8: memref<8x128xf32, #tpu.memory_space<vmem>>) attributes {dimension_semantics = [#tpu.dimension_semantics<parallel>], iteration_bounds = array<i64: 1>, scalar_prefetch = 0 : i64, scratch_operands = 0 : i64, tpu.core_type = #tpu.core_type<tc>, window_params = [{transform_indices = @transform_0, window_bounds = array<i64: 8, 400>}, {pipeline_mode = #tpu.pipeline_mode<synchronous>, transform_indices = @transform_1, window_bounds = array<i64: 400, 128>}, {pipeline_mode = #tpu.pipeline_mode<synchronous>, transform_indices = @transform_2, window_bounds = array<i64: 1, 128>}, {pipeline_mode = #tpu.pipeline_mode<synchronous>, transform_indices = @transform_3, window_bounds = array<i64: 128, 128>}, {pipeline_mode = #tpu.pipeline_mode<synchronous>, transform_indices = @transform_4, window_bounds = array<i64: 1, 128>}, {pipeline_mode = #tpu.pipeline_mode<synchronous>, transform_indices = @transform_5, window_bounds = array<i64: 128, 128>}, {pipeline_mode = #tpu.pipeline_mode<synchronous>, transform_indices = @transform_6, window_bounds = array<i64: 1, 128>}, {transform_indices = @transform_7, window_bounds = array<i64: 8, 128>}]} {
    %c0 = arith.constant 0 : index
    %c0_0 = arith.constant 0 : index
    %0 = vector.load %arg1[%c0, %c0_0] : memref<8x400xf32, #tpu.memory_space<vmem>>, vector<8x400xf32>
    %c0_1 = arith.constant 0 : index
    %c0_2 = arith.constant 0 : index
    %1 = vector.load %arg2[%c0_1, %c0_2] : memref<400x128xbf16, #tpu.memory_space<vmem>>, vector<400x128xbf16>
    %2 = arith.extf %1 : vector<400x128xbf16> to vector<400x128xf32>
    %cst = arith.constant dense<0.000000e+00> : vector<8x128xf32>
    %3 = tpu.matmul %0, %2, %cst {dimension_numbers = #tpu.dot_dimension_numbers<[1], [0], [0], [1], [0, 0, 1, 1], [], []>} : vector<8x400xf32>, vector<400x128xf32>, vector<8x128xf32> -> vector<8x128xf32>
    %c0_3 = arith.constant 0 : index
    %c0_4 = arith.constant 0 : index
    %4 = vector.load %arg3[%c0_3, %c0_4] : memref<1x128xf32, #tpu.memory_space<vmem>>, vector<1x128xf32>
    %5 = vector.broadcast %4 : vector<1x128xf32> to vector<8x128xf32>
    %6 = arith.addf %3, %5 : vector<8x128xf32>
    %cst_5 = arith.constant 0.000000e+00 : f32
    %7 = vector.broadcast %cst_5 : f32 to vector<8x128xf32>
    %8 = arith.maximumf %6, %7 : vector<8x128xf32>
    %c0_6 = arith.constant 0 : index
    %c0_7 = arith.constant 0 : index
    %9 = vector.load %arg4[%c0_6, %c0_7] : memref<128x128xbf16, #tpu.memory_space<vmem>>, vector<128x128xbf16>
    %10 = arith.extf %9 : vector<128x128xbf16> to vector<128x128xf32>
    %cst_8 = arith.constant dense<0.000000e+00> : vector<8x128xf32>
    %11 = tpu.matmul %8, %10, %cst_8 {dimension_numbers = #tpu.dot_dimension_numbers<[1], [0], [0], [1], [0, 0, 1, 1], [], []>} : vector<8x128xf32>, vector<128x128xf32>, vector<8x128xf32> -> vector<8x128xf32>
    %c0_9 = arith.constant 0 : index
    %c0_10 = arith.constant 0 : index
    %12 = vector.load %arg5[%c0_9, %c0_10] : memref<1x128xf32, #tpu.memory_space<vmem>>, vector<1x128xf32>
    %13 = vector.broadcast %12 : vector<1x128xf32> to vector<8x128xf32>
    %14 = arith.addf %11, %13 : vector<8x128xf32>
    %cst_11 = arith.constant 0.000000e+00 : f32
    %15 = vector.broadcast %cst_11 : f32 to vector<8x128xf32>
    %16 = arith.maximumf %14, %15 : vector<8x128xf32>
    %c0_12 = arith.constant 0 : index
    %c0_13 = arith.constant 0 : index
    %17 = vector.load %arg6[%c0_12, %c0_13] : memref<128x128xbf16, #tpu.memory_space<vmem>>, vector<128x128xbf16>
    %18 = arith.extf %17 : vector<128x128xbf16> to vector<128x128xf32>
    %cst_14 = arith.constant dense<0.000000e+00> : vector<8x128xf32>
    %19 = tpu.matmul %16, %18, %cst_14 {dimension_numbers = #tpu.dot_dimension_numbers<[1], [0], [0], [1], [0, 0, 1, 1], [], []>} : vector<8x128xf32>, vector<128x128xf32>, vector<8x128xf32> -> vector<8x128xf32>
    %c0_15 = arith.constant 0 : index
    %c0_16 = arith.constant 0 : index
    %20 = vector.load %arg7[%c0_15, %c0_16] : memref<1x128xf32, #tpu.memory_space<vmem>>, vector<1x128xf32>
    %21 = vector.broadcast %20 : vector<1x128xf32> to vector<8x128xf32>
    %22 = arith.addf %19, %21 : vector<8x128xf32>
    %c0_17 = arith.constant 0 : index
    %c0_18 = arith.constant 0 : index
    %23 = vector.load %arg8[%c0_17, %c0_18] : memref<8x128xf32, #tpu.memory_space<vmem>>, vector<8x128xf32>
    tpu.vector_store %arg8[%c0_17, %c0_18], %22 {strides = array<i32>} : memref<8x128xf32, #tpu.memory_space<vmem>>, vector<8x128xf32>,
    return
  }
  func.func @transform_0(%arg0: i32) -> (i32, i32) {
    %c0_i32 = arith.constant 0 : i32
    %c0_i32_0 = arith.constant 0 : i32
    return %arg0, %c0_i32 : i32, i32
  }
  func.func @transform_1(%arg0: i32) -> (i32, i32) {
    %c0_i32 = arith.constant 0 : i32
    %c0_i32_0 = arith.constant 0 : i32
    %c0_i32_1 = arith.constant 0 : i32
    return %c0_i32, %c0_i32_0 : i32, i32
  }
  func.func @transform_2(%arg0: i32) -> (i32, i32) {
    %c0_i32 = arith.constant 0 : i32
    %c0_i32_0 = arith.constant 0 : i32
    %c0_i32_1 = arith.constant 0 : i32
    return %c0_i32, %c0_i32_0 : i32, i32
  }
  func.func @transform_3(%arg0: i32) -> (i32, i32) {
    %c0_i32 = arith.constant 0 : i32
    %c0_i32_0 = arith.constant 0 : i32
    %c0_i32_1 = arith.constant 0 : i32
    return %c0_i32, %c0_i32_0 : i32, i32
  }
  func.func @transform_4(%arg0: i32) -> (i32, i32) {
    %c0_i32 = arith.constant 0 : i32
    %c0_i32_0 = arith.constant 0 : i32
    %c0_i32_1 = arith.constant 0 : i32
    return %c0_i32, %c0_i32_0 : i32, i32
  }
  func.func @transform_5(%arg0: i32) -> (i32, i32) {
    %c0_i32 = arith.constant 0 : i32
    %c0_i32_0 = arith.constant 0 : i32
    %c0_i32_1 = arith.constant 0 : i32
    return %c0_i32, %c0_i32_0 : i32, i32
  }
  func.func @transform_6(%arg0: i32) -> (i32, i32) {
    %c0_i32 = arith.constant 0 : i32
    %c0_i32_0 = arith.constant 0 : i32
    %c0_i32_1 = arith.constant 0 : i32
    return %c0_i32, %c0_i32_0 : i32, i32
  }
  func.func @transform_7(%arg0: i32) -> (i32, i32) {
    %c0_i32 = arith.constant 0 : i32
    %c0_i32_0 = arith.constant 0 : i32
    return %arg0, %c0_i32 : i32, i32
  }
}

</mosaic_0001>

<llo_original>
// kernel: server_net_forward.1
$region0: #{server_net_forward.1}
  #allocation0 [shape = 'u32[]', space=smem, size = 0x4, offset = 0x4, fixed_abs, tag = 'smem constant byte address 0x4 - core index']
  #allocation1 [shape = 'u32[144,128]{1,0:T(1,128)}', space=vmem, size = 0x12000, scoped, tag = 'internal scratch']
  %s0 = inlined_call_operand.vmem [shape: f32[8,400], index: 0, kind: input, shape index: {}]
  %s1 = inlined_call_operand.vmem [shape: bf16[400,128], index: 1, kind: input, shape index: {}]
  %s2 = inlined_call_operand.vmem [shape: f32[1,128], index: 2, kind: input, shape index: {}]
  %s3 = inlined_call_operand.vmem [shape: bf16[128,128], index: 3, kind: input, shape index: {}]
  %s4 = inlined_call_operand.vmem [shape: f32[1,128], index: 4, kind: input, shape index: {}]
  %s5 = inlined_call_operand.vmem [shape: bf16[128,128], index: 5, kind: input, shape index: {}]
  %s6 = inlined_call_operand.vmem [shape: f32[1,128], index: 6, kind: input, shape index: {}]
  %s7 = inlined_call_operand.hbm [shape: f32[8,128], index: 7, kind: output, shape index: {}]
  %s8 = sld [smem:[#allocation0]]
  $region38: #{server_net_forward.1} parent=0
    _
  %s10 = ssub.s32 1, %s8
  %s11 = scalar_select 0, %s10, %s8
  $region1: #{server_net_forward.1} parent=0
    #allocation2 [shape = 'u8[4096]{0}', space=vmem, size = 0x1000, scoped, tag = 'output window, operand 0, single buffered']
    #allocation3 [shape = 's32[1]{0}', space=sflag, size = 0x4, scoped, tag = 'scoped memory for server_net_forward.1']
    %12 = vsyncpa [#allocation3], 0
    // Predicated region
    $region2: #{server_net_forward.1} parent=1 // pred_check
      _
    $region3: #{server_net_forward.1} parent=1 // pred_check_branch
      %14 = sbr.rel (0) target = $region5
    $region4: #{server_net_forward.1} parent=1 // pred_region
      _
    $region5: #{server_net_forward.1} parent=1 // pred_fallthru
      _
    // Predicated region
    $region6: #{server_net_forward.1} parent=1 // pred_check
      _
    $region7: #{server_net_forward.1} parent=1 // pred_check_branch
      %16 = sbr.rel (0) target = $region9
    $region8: #{server_net_forward.1} parent=1 // pred_region
      _
    $region9: #{server_net_forward.1} parent=1 // pred_fallthru
      _
    // Predicated region
    $region10: #{server_net_forward.1} parent=1 // pred_check
      _
    $region11: #{server_net_forward.1} parent=1 // pred_check_branch
      %18 = sbr.rel (0) target = $region13
    $region12: #{server_net_forward.1} parent=1 // pred_region
      _
    $region13: #{server_net_forward.1} parent=1 // pred_fallthru
      _
    // Predicated region
    $region14: #{server_net_forward.1} parent=1 // pred_check
      _
    $region15: #{server_net_forward.1} parent=1 // pred_check_branch
      %20 = sbr.rel (0) target = $region17
    $region16: #{server_net_forward.1} parent=1 // pred_region
      _
    $region17: #{server_net_forward.1} parent=1 // pred_fallthru
      _
    // Predicated region
    $region18: #{server_net_forward.1} parent=1 // pred_check
      _
    $region19: #{server_net_forward.1} parent=1 // pred_check_branch
      %22 = sbr.rel (0) target = $region21
    $region20: #{server_net_forward.1} parent=1 // pred_region
      _
    $region21: #{server_net_forward.1} parent=1 // pred_fallthru
      _
    // Predicated region
    $region22: #{server_net_forward.1} parent=1 // pred_check
      _
    $region23: #{server_net_forward.1} parent=1 // pred_check_branch
      %24 = sbr.rel (0) target = $region25
    $region24: #{server_net_forward.1} parent=1 // pred_region
      _
    $region25: #{server_net_forward.1} parent=1 // pred_fallthru
      _
    // Predicated region
    $region26: #{server_net_forward.1} parent=1 // pred_check
      _
    $region27: #{server_net_forward.1} parent=1 // pred_check_branch
      %26 = sbr.rel (0) target = $region29
    $region28: #{server_net_forward.1} parent=1 // pred_region
      _
    $region29: #{server_net_forward.1} parent=1 // pred_fallthru
      _
    %v27 = vld [vmem:[%s0] sm:$0xff]
    %v28 = vld [vmem:[%s0 + $0x8] sm:$0xff]
    %v29 = vld [vmem:[%s0 + $0x10] sm:$0xff]
    %v30 = vld [vmem:[%s0 + $0x18] sm:$0xff]
    %v31 = vld [vmem:[%s1] sm:$0xf]
    %v32 = vld [vmem:[%s1 + $0x4] sm:$0xf]
    %v33 = vld [vmem:[%s1 + $0x8] sm:$0xf]
    %v34 = vld [vmem:[%s1 + $0xc] sm:$0xf]
    %v35 = vld [vmem:[%s1 + $0x10] sm:$0xf]
    %v36 = vld [vmem:[%s1 + $0x14] sm:$0xf]
    %v37 = vld [vmem:[%s1 + $0x18] sm:$0xf]
    %v38 = vld [vmem:[%s1 + $0x1c] sm:$0xf]
    %v39 = vld [vmem:[%s1 + $0x20] sm:$0xf]
    %v40 = vld [vmem:[%s1 + $0x24] sm:$0xf]
    %v41 = vld [vmem:[%s1 + $0x28] sm:$0xf]
    %v42 = vld [vmem:[%s1 + $0x2c] sm:$0xf]
    %v43 = vld [vmem:[%s1 + $0x30] sm:$0xf]
    %v44 = vld [vmem:[%s1 + $0x34] sm:$0xf]
    %v45 = vld [vmem:[%s1 + $0x38] sm:$0xf]
    %v46 = vld [vmem:[%s1 + $0x3c] sm:$0xf]
    %v47 = vld [vmem:[%s1 + $0x40] sm:$0xf]
    %v48 = vld [vmem:[%s1 + $0x44] sm:$0xf]
    %v49 = vld [vmem:[%s1 + $0x48] sm:$0xf]
    %v50 = vld [vmem:[%s1 + $0x4c] sm:$0xf]
    %v51 = vld [vmem:[%s1 + $0x50] sm:$0xf]
    %v52 = vld [vmem:[%s1 + $0x54] sm:$0xf]
    %v53 = vld [vmem:[%s1 + $0x58] sm:$0xf]
    %v54 = vld [vmem:[%s1 + $0x5c] sm:$0xf]
    %v55 = vld [vmem:[%s1 + $0x60] sm:$0xf]
    %v56 = vld [vmem:[%s1 + $0x64] sm:$0xf]
    %v57 = vld [vmem:[%s1 + $0x68] sm:$0xf]
    %v58 = vld [vmem:[%s1 + $0x6c] sm:$0xf]
    %v59 = vld [vmem:[%s1 + $0x70] sm:$0xf]
    %v60 = vld [vmem:[%s1 + $0x74] sm:$0xf]
    %v61 = vld [vmem:[%s1 + $0x78] sm:$0xf]
    %v62 = vld [vmem:[%s1 + $0x7c] sm:$0xf]
    %v63 = vld [vmem:[%s1 + $0x80] sm:$0xf]
    %v64 = vld [vmem:[%s1 + $0x84] sm:$0xf]
    %v65 = vld [vmem:[%s1 + $0x88] sm:$0xf]
    %v66 = vld [vmem:[%s1 + $0x8c] sm:$0xf]
    %v67 = vld [vmem:[%s1 + $0x90] sm:$0xf]
    %v68 = vld [vmem:[%s1 + $0x94] sm:$0xf]
    %v69 = vld [vmem:[%s1 + $0x98] sm:$0xf]
    %v70 = vld [vmem:[%s1 + $0x9c] sm:$0xf]
    %v71 = vld [vmem:[%s1 + $0xa0] sm:$0xf]
    %v72 = vld [vmem:[%s1 + $0xa4] sm:$0xf]
    %v73 = vld [vmem:[%s1 + $0xa8] sm:$0xf]
    %v74 = vld [vmem:[%s1 + $0xac] sm:$0xf]
    %v75 = vld [vmem:[%s1 + $0xb0] sm:$0xf]
    %v76 = vld [vmem:[%s1 + $0xb4] sm:$0xf]
    %v77 = vld [vmem:[%s1 + $0xb8] sm:$0xf]
    %v78 = vld [vmem:[%s1 + $0xbc] sm:$0xf]
    %v79 = vld [vmem:[%s1 + $0xc0] sm:$0xf]
    %v80 = vld [vmem:[%s1 + $0xc4] sm:$0xf]
    %v81 = vunpack.c.l.bf16 %v31
    %v82 = vunpack.c.l.bf16 %v32
    %v83 = vunpack.c.l.bf16 %v33
    %v84 = vunpack.c.l.bf16 %v34
    %v85 = vunpack.c.l.bf16 %v35
    %v86 = vunpack.c.l.bf16 %v36
    %v87 = vunpack.c.l.bf16 %v37
    %v88 = vunpack.c.l.bf16 %v38
    %v89 = vunpack.c.l.bf16 %v39
    %v90 = vunpack.c.l.bf16 %v40
    %v91 = vunpack.c.l.bf16 %v41
    %v92 = vunpack.c.l.bf16 %v42
    %v93 = vunpack.c.l.bf16 %v43
    %v94 = vunpack.c.l.bf16 %v44
    %v95 = vunpack.c.l.bf16 %v45
    %v96 = vunpack.c.l.bf16 %v46
    %v97 = vunpack.c.l.bf16 %v47
    %v98 = vunpack.c.l.bf16 %v48
    %v99 = vunpack.c.l.bf16 %v49
    %v100 = vunpack.c.l.bf16 %v50
    %v101 = vunpack.c.l.bf16 %v51
    %v102 = vunpack.c.l.bf16 %v52
    %v103 = vunpack.c.l.bf16 %v53
    %v104 = vunpack.c.l.bf16 %v54
    %v105 = vunpack.c.l.bf16 %v55
    %v106 = vunpack.c.l.bf16 %v56
    %v107 = vunpack.c.l.bf16 %v57
    %v108 = vunpack.c.l.bf16 %v58
    %v109 = vunpack.c.l.bf16 %v59
    %v110 = vunpack.c.l.bf16 %v60
    %v111 = vunpack.c.l.bf16 %v61
    %v112 = vunpack.c.l.bf16 %v62
    %v113 = vunpack.c.l.bf16 %v63
    %v114 = vunpack.c.l.bf16 %v64
    %v115 = vunpack.c.l.bf16 %v65
    %v116 = vunpack.c.l.bf16 %v66
    %v117 = vunpack.c.l.bf16 %v67
    %v118 = vunpack.c.l.bf16 %v68
    %v119 = vunpack.c.l.bf16 %v69
    %v120 = vunpack.c.l.bf16 %v70
    %v121 = vunpack.c.l.bf16 %v71
    %v122 = vunpack.c.l.bf16 %v72
    %v123 = vunpack.c.l.bf16 %v73
    %v124 = vunpack.c.l.bf16 %v74
    %v125 = vunpack.c.l.bf16 %v75
    %v126 = vunpack.c.l.bf16 %v76
    %v127 = vunpack.c.l.bf16 %v77
    %v128 = vunpack.c.l.bf16 %v78
    %v129 = vunpack.c.l.bf16 %v79
    %v130 = vunpack.c.l.bf16 %v80
    %v131 = vld [vmem:[%s2] sm:$0x1]
    %v133 = vlaneseq
    %v134 = vshrl.u32 %v133, 7
    %v135 = vsub.s32 0, %v134
    %v136 = vrot.slane %v131, %v135
    %vm138 = vcmask 130048
    %v140 = vsel %vm138, %v30, 0
    %142 = vmatprep.subr.mxu0 0.0
    %143 = vmatpush1.msra.mxu0 %v81
    %144 = vmatprep.subr.mxu0 0.0
    %145 = vmatpush1.msra.mxu0 %v82
    %146 = vmatprep.subr.mxu0 0.0
    %147 = vmatpush1.msra.mxu0 %v83
    %148 = vmatprep.subr.mxu0 0.0
    %149 = vmatpush1.msra.mxu0 %v84
    %150 = vmatprep.subr.mxu0 0.0
    %151 = vmatpush1.msra.mxu0 %v85
    %152 = vmatprep.subr.mxu0 0.0
    %153 = vmatpush1.msra.mxu0 %v86
    %154 = vmatprep.subr.mxu0 0.0
    %155 = vmatpush1.msra.mxu0 %v87
    %156 = vmatprep.subr.mxu0 0.0
    %157 = vmatpush1.msra.mxu0 %v88
    %158 = vmatprep.subr.mxu0 0.0
    %159 = vmatpush1.msra.mxu0 %v89
    %160 = vmatprep.subr.mxu0 0.0
    %161 = vmatpush1.msra.mxu0 %v90
    %162 = vmatprep.subr.mxu0 0.0
    %163 = vmatpush1.msra.mxu0 %v91
    %164 = vmatprep.subr.mxu0 0.0
    %165 = vmatpush1.msra.mxu0 %v92
    %166 = vmatprep.subr.mxu0 0.0
    %167 = vmatpush1.msra.mxu0 %v93
    %168 = vmatprep.subr.mxu0 0.0
    %169 = vmatpush1.msra.mxu0 %v94
    %170 = vmatprep.subr.mxu0 0.0
    %171 = vmatpush1.msra.mxu0 %v95
    %172 = vmatprep.subr.mxu0 0.0
    %173 = vmatpush1.msra.mxu0 %v96
    %174 = vmatprep.subr.mxu0 0.0
    %175 = vmatpush1.msra.mxu0 %v97
    %176 = vmatprep.subr.mxu0 0.0
    %177 = vmatpush1.msra.mxu0 %v98
    %178 = vmatprep.subr.mxu0 0.0
    %179 = vmatpush1.msra.mxu0 %v99
    %180 = vmatprep.subr.mxu0 0.0
    %181 = vmatpush1.msra.mxu0 %v100
    %182 = vmatprep.subr.mxu0 0.0
    %183 = vmatpush1.msra.mxu0 %v101
    %184 = vmatprep.subr.mxu0 0.0
    %185 = vmatpush1.msra.mxu0 %v102
    %186 = vmatprep.subr.mxu0 0.0
    %187 = vmatpush1.msra.mxu0 %v103
    %188 = vmatprep.subr.mxu0 0.0
    %189 = vmatpush1.msra.mxu0 %v104
    %190 = vmatprep.subr.mxu0 0.0
    %191 = vmatpush1.msra.mxu0 %v105
    %192 = vmatprep.subr.mxu0 0.0
    %193 = vmatpush1.msra.mxu0 %v106
    %194 = vmatprep.subr.mxu0 0.0
    %195 = vmatpush1.msra.mxu0 %v107
    %196 = vmatprep.subr.mxu0 0.0
    %197 = vmatpush1.msra.mxu0 %v108
    %198 = vmatprep.subr.mxu0 0.0
    %199 = vmatpush1.msra.mxu0 %v109
    %200 = vmatprep.subr.mxu0 0.0
    %201 = vmatpush1.msra.mxu0 %v110
    %202 = vmatprep.subr.mxu0 0.0
    %203 = vmatpush1.msra.mxu0 %v111
    %204 = vmatprep.subr.mxu0 0.0
    %205 = vmatpush1.msra.mxu0 %v112
    %206 = vmatprep.mubr.f32.mxu0 %v28
    %207 = vmatmul.mubr.f32.gmra.mrb[0].mxu0 %v27
    %v208 = vpop.f32.mrb[0].mxu0
    %v209 = vadd.f32 %v136, %v208
    %v210 = vpop.f32.mrb[0].mxu0
    %211 = vdwg.mxu0
    %212 = vmatprep.subr.mxu0 0.0
    %213 = vmatpush1.msra.mxu0 %v113
    %214 = vmatprep.subr.mxu0 0.0
    %215 = vmatpush1.msra.mxu0 %v114
    %216 = vmatprep.subr.mxu0 0.0
    %217 = vmatpush1.msra.mxu0 %v115
    %218 = vmatprep.subr.mxu0 0.0
    %219 = vmatpush1.msra.mxu0 %v116
    %220 = vmatprep.subr.mxu0 0.0
    %221 = vmatpush1.msra.mxu0 %v117
    %222 = vmatprep.subr.mxu0 0.0
    %223 = vmatpush1.msra.mxu0 %v118
    %224 = vmatprep.subr.mxu0 0.0
    %225 = vmatpush1.msra.mxu0 %v119
    %226 = vmatprep.subr.mxu0 0.0
    %227 = vmatpush1.msra.mxu0 %v120
    %228 = vmatprep.subr.mxu0 0.0
    %229 = vmatpush1.msra.mxu0 %v121
    %230 = vmatprep.subr.mxu0 0.0
    %231 = vmatpush1.msra.mxu0 %v122
    %232 = vmatprep.subr.mxu0 0.0
    %233 = vmatpush1.msra.mxu0 %v123
    %234 = vmatprep.subr.mxu0 0.0
    %235 = vmatpush1.msra.mxu0 %v124
    %236 = vmatprep.subr.mxu0 0.0
    %237 = vmatpush1.msra.mxu0 %v125
    %238 = vmatprep.subr.mxu0 0.0
    %239 = vmatpush1.msra.mxu0 %v126
    %240 = vmatprep.subr.mxu0 0.0
    %241 = vmatpush1.msra.mxu0 %v127
    %242 = vmatprep.subr.mxu0 0.0
    %243 = vmatpush1.msra.mxu0 %v128
    %244 = vmatprep.subr.mxu0 0.0
    %245 = vmatpush1.msra.mxu0 %v129
    %246 = vmatprep.subr.mxu0 0.0
    %247 = vmatpush1.msra.mxu0 %v130
    %248 = vmatprep.subr.mxu0 0.0
    %249 = vmatpush1.msra.mxu0 0.0
    %250 = vmatprep.subr.mxu0 0.0
    %251 = vmatpush1.msra.mxu0 0.0
    %252 = vmatprep.subr.mxu0 0.0
    %253 = vmatpush1.msra.mxu0 0.0
    %254 = vmatprep.subr.mxu0 0.0
    %255 = vmatpush1.msra.mxu0 0.0
    %256 = vmatprep.subr.mxu0 0.0
    %257 = vmatpush1.msra.mxu0 0.0
    %258 = vmatprep.subr.mxu0 0.0
    %259 = vmatpush1.msra.mxu0 0.0
    %260 = vmatprep.subr.mxu0 0.0
    %261 = vmatpush1.msra.mxu0 0.0
    %262 = vmatprep.subr.mxu0 0.0
    %263 = vmatpush1.msra.mxu0 0.0
    %264 = vmatprep.subr.mxu0 0.0
    %265 = vmatpush1.msra.mxu0 0.0
    %266 = vmatprep.subr.mxu0 0.0
    %267 = vmatpush1.msra.mxu0 0.0
    %268 = vmatprep.subr.mxu0 0.0
    %269 = vmatpush1.msra.mxu0 0.0
    %270 = vmatprep.subr.mxu0 0.0
    %271 = vmatpush1.msra.mxu0 0.0
    %272 = vmatprep.subr.mxu0 0.0
    %273 = vmatpush1.msra.mxu0 0.0
    %274 = vmatprep.subr.mxu0 0.0
    %275 = vmatpush1.msra.mxu0 0.0
    %276 = vmatprep.mubr.f32.mxu0 %v140
    %277 = vmatmul.mubr.f32.gmra.mrb[0].mxu0 %v29
    %v278 = vpop.f32.mrb[0].mxu0
    %v279 = vadd.f32 %v209, %v278
    %v280 = vpop.f32.mrb[0].mxu0
    %281 = vdwg.mxu0
    %v282 = vmax.f32 %v279, 0.0
    %v283 = vld [vmem:[%s3] sm:$0xf]
    %v284 = vld [vmem:[%s3 + $0x4] sm:$0xf]
    %v285 = vld [vmem:[%s3 + $0x8] sm:$0xf]
    %v286 = vld [vmem:[%s3 + $0xc] sm:$0xf]
    %v287 = vld [vmem:[%s3 + $0x10] sm:$0xf]
    %v288 = vld [vmem:[%s3 + $0x14] sm:$0xf]
    %v289 = vld [vmem:[%s3 + $0x18] sm:$0xf]
    %v290 = vld [vmem:[%s3 + $0x1c] sm:$0xf]
    %v291 = vld [vmem:[%s3 + $0x20] sm:$0xf]
    %v292 = vld [vmem:[%s3 + $0x24] sm:$0xf]
    %v293 = vld [vmem:[%s3 + $0x28] sm:$0xf]
    %v294 = vld [vmem:[%s3 + $0x2c] sm:$0xf]
    %v295 = vld [vmem:[%s3 + $0x30] sm:$0xf]
    %v296 = vld [vmem:[%s3 + $0x34] sm:$0xf]
    %v297 = vld [vmem:[%s3 + $0x38] sm:$0xf]
    %v298 = vld [vmem:[%s3 + $0x3c] sm:$0xf]
    %v299 = vunpack.c.l.bf16 %v283
    %v300 = vunpack.c.l.bf16 %v284
    %v301 = vunpack.c.l.bf16 %v285
    %v302 = vunpack.c.l.bf16 %v286
    %v303 = vunpack.c.l.bf16 %v287
    %v304 = vunpack.c.l.bf16 %v288
    %v305 = vunpack.c.l.bf16 %v289
    %v306 = vunpack.c.l.bf16 %v290
    %v307 = vunpack.c.l.bf16 %v291
    %v308 = vunpack.c.l.bf16 %v292
    %v309 = vunpack.c.l.bf16 %v293
    %v310 = vunpack.c.l.bf16 %v294
    %v311 = vunpack.c.l.bf16 %v295
    %v312 = vunpack.c.l.bf16 %v296
    %v313 = vunpack.c.l.bf16 %v297
    %v314 = vunpack.c.l.bf16 %v298
    %v315 = vld [vmem:[%s4] sm:$0x1]
    %v317 = vlaneseq
    %v318 = vshrl.u32 %v317, 7
    %v319 = vsub.s32 0, %v318
    %v320 = vrot.slane %v315, %v319
    %322 = vmatprep.subr.mxu0 0.0
    %323 = vmatpush1.msra.mxu0 %v299
    %324 = vmatprep.subr.mxu0 0.0
    %325 = vmatpush1.msra.mxu0 %v300
    %326 = vmatprep.subr.mxu0 0.0
    %327 = vmatpush1.msra.mxu0 %v301
    %328 = vmatprep.subr.mxu0 0.0
    %329 = vmatpush1.msra.mxu0 %v302
    %330 = vmatprep.subr.mxu0 0.0
    %331 = vmatpush1.msra.mxu0 %v303
    %332 = vmatprep.subr.mxu0 0.0
    %333 = vmatpush1.msra.mxu0 %v304
    %334 = vmatprep.subr.mxu0 0.0
    %335 = vmatpush1.msra.mxu0 %v305
    %336 = vmatprep.subr.mxu0 0.0
    %337 = vmatpush1.msra.mxu0 %v306
    %338 = vmatprep.subr.mxu0 0.0
    %339 = vmatpush1.msra.mxu0 %v307
    %340 = vmatprep.subr.mxu0 0.0
    %341 = vmatpush1.msra.mxu0 %v308
    %342 = vmatprep.subr.mxu0 0.0
    %343 = vmatpush1.msra.mxu0 %v309
    %344 = vmatprep.subr.mxu0 0.0
    %345 = vmatpush1.msra.mxu0 %v310
    %346 = vmatprep.subr.mxu0 0.0
    %347 = vmatpush1.msra.mxu0 %v311
    %348 = vmatprep.subr.mxu0 0.0
    %349 = vmatpush1.msra.mxu0 %v312
    %350 = vmatprep.subr.mxu0 0.0
    %351 = vmatpush1.msra.mxu0 %v313
    %352 = vmatprep.subr.mxu0 0.0
    %353 = vmatpush1.msra.mxu0 %v314
    %354 = vmatprep.subr.mxu0 0.0
    %355 = vmatpush1.msra.mxu0 0.0
    %356 = vmatprep.subr.mxu0 0.0
    %357 = vmatpush1.msra.mxu0 0.0
    %358 = vmatprep.subr.mxu0 0.0
    %359 = vmatpush1.msra.mxu0 0.0
    %360 = vmatprep.subr.mxu0 0.0
    %361 = vmatpush1.msra.mxu0 0.0
    %362 = vmatprep.subr.mxu0 0.0
    %363 = vmatpush1.msra.mxu0 0.0
    %364 = vmatprep.subr.mxu0 0.0
    %365 = vmatpush1.msra.mxu0 0.0
    %366 = vmatprep.subr.mxu0 0.0
    %367 = vmatpush1.msra.mxu0 0.0
    %368 = vmatprep.subr.mxu0 0.0
    %369 = vmatpush1.msra.mxu0 0.0
    %370 = vmatprep.subr.mxu0 0.0
    %371 = vmatpush1.msra.mxu0 0.0
    %372 = vmatprep.subr.mxu0 0.0
    %373 = vmatpush1.msra.mxu0 0.0
    %374 = vmatprep.subr.mxu0 0.0
    %375 = vmatpush1.msra.mxu0 0.0
    %376 = vmatprep.subr.mxu0 0.0
    %377 = vmatpush1.msra.mxu0 0.0
    %378 = vmatprep.subr.mxu0 0.0
    %379 = vmatpush1.msra.mxu0 0.0
    %380 = vmatprep.subr.mxu0 0.0
    %381 = vmatpush1.msra.mxu0 0.0
    %382 = vmatprep.subr.mxu0 0.0
    %383 = vmatpush1.msra.mxu0 0.0
    %384 = vmatprep.subr.mxu0 0.0
    %385 = vmatpush1.msra.mxu0 0.0
    %386 = vmatprep.mubr.f32.mxu0 0.0
    %387 = vmatmul.mubr.f32.gmra.mrb[0].mxu0 %v282
    %v388 = vpop.f32.mrb[0].mxu0
    %v389 = vadd.f32 %v320, %v388
    %v390 = vpop.f32.mrb[0].mxu0
    %391 = vdwg.mxu0
    %v392 = vmax.f32 %v389, 0.0
    %v393 = vld [vmem:[%s5] sm:$0xf]
    %v394 = vld [vmem:[%s5 + $0x4] sm:$0xf]
    %v395 = vld [vmem:[%s5 + $0x8] sm:$0xf]
    %v396 = vld [vmem:[%s5 + $0xc] sm:$0xf]
    %v397 = vld [vmem:[%s5 + $0x10] sm:$0xf]
    %v398 = vld [vmem:[%s5 + $0x14] sm:$0xf]
    %v399 = vld [vmem:[%s5 + $0x18] sm:$0xf]
    %v400 = vld [vmem:[%s5 + $0x1c] sm:$0xf]
    %v401 = vld [vmem:[%s5 + $0x20] sm:$0xf]
    %v402 = vld [vmem:[%s5 + $0x24] sm:$0xf]
    %v403 = vld [vmem:[%s5 + $0x28] sm:$0xf]
    %v404 = vld [vmem:[%s5 + $0x2c] sm:$0xf]
    %v405 = vld [vmem:[%s5 + $0x30] sm:$0xf]
    %v406 = vld [vmem:[%s5 + $0x34] sm:$0xf]
    %v407 = vld [vmem:[%s5 + $0x38] sm:$0xf]
    %v408 = vld [vmem:[%s5 + $0x3c] sm:$0xf]
    %v409 = vunpack.c.l.bf16 %v393
    %v410 = vunpack.c.l.bf16 %v394
    %v411 = vunpack.c.l.bf16 %v395
    %v412 = vunpack.c.l.bf16 %v396
    %v413 = vunpack.c.l.bf16 %v397
    %v414 = vunpack.c.l.bf16 %v398
    %v415 = vunpack.c.l.bf16 %v399
    %v416 = vunpack.c.l.bf16 %v400
    %v417 = vunpack.c.l.bf16 %v401
    %v418 = vunpack.c.l.bf16 %v402
    %v419 = vunpack.c.l.bf16 %v403
    %v420 = vunpack.c.l.bf16 %v404
    %v421 = vunpack.c.l.bf16 %v405
    %v422 = vunpack.c.l.bf16 %v406
    %v423 = vunpack.c.l.bf16 %v407
    %v424 = vunpack.c.l.bf16 %v408
    %v425 = vld [vmem:[%s6] sm:$0x1]
    %v427 = vlaneseq
    %v428 = vshrl.u32 %v427, 7
    %v429 = vsub.s32 0, %v428
    %v430 = vrot.slane %v425, %v429
    %432 = vmatprep.subr.mxu0 0.0
    %433 = vmatpush1.msra.mxu0 %v409
    %434 = vmatprep.subr.mxu0 0.0
    %435 = vmatpush1.msra.mxu0 %v410
    %436 = vmatprep.subr.mxu0 0.0
    %437 = vmatpush1.msra.mxu0 %v411
    %438 = vmatprep.subr.mxu0 0.0
    %439 = vmatpush1.msra.mxu0 %v412
    %440 = vmatprep.subr.mxu0 0.0
    %441 = vmatpush1.msra.mxu0 %v413
    %442 = vmatprep.subr.mxu0 0.0
    %443 = vmatpush1.msra.mxu0 %v414
    %444 = vmatprep.subr.mxu0 0.0
    %445 = vmatpush1.msra.mxu0 %v415
    %446 = vmatprep.subr.mxu0 0.0
    %447 = vmatpush1.msra.mxu0 %v416
    %448 = vmatprep.subr.mxu0 0.0
    %449 = vmatpush1.msra.mxu0 %v417
    %450 = vmatprep.subr.mxu0 0.0
    %451 = vmatpush1.msra.mxu0 %v418
    %452 = vmatprep.subr.mxu0 0.0
    %453 = vmatpush1.msra.mxu0 %v419
    %454 = vmatprep.subr.mxu0 0.0
    %455 = vmatpush1.msra.mxu0 %v420
    %456 = vmatprep.subr.mxu0 0.0
    %457 = vmatpush1.msra.mxu0 %v421
    %458 = vmatprep.subr.mxu0 0.0
    %459 = vmatpush1.msra.mxu0 %v422
    %460 = vmatprep.subr.mxu0 0.0
    %461 = vmatpush1.msra.mxu0 %v423
    %462 = vmatprep.subr.mxu0 0.0
    %463 = vmatpush1.msra.mxu0 %v424
    %464 = vmatprep.subr.mxu0 0.0
    %465 = vmatpush1.msra.mxu0 0.0
    %466 = vmatprep.subr.mxu0 0.0
    %467 = vmatpush1.msra.mxu0 0.0
    %468 = vmatprep.subr.mxu0 0.0
    %469 = vmatpush1.msra.mxu0 0.0
    %470 = vmatprep.subr.mxu0 0.0
    %471 = vmatpush1.msra.mxu0 0.0
    %472 = vmatprep.subr.mxu0 0.0
    %473 = vmatpush1.msra.mxu0 0.0
    %474 = vmatprep.subr.mxu0 0.0
    %475 = vmatpush1.msra.mxu0 0.0
    %476 = vmatprep.subr.mxu0 0.0
    %477 = vmatpush1.msra.mxu0 0.0
    %478 = vmatprep.subr.mxu0 0.0
    %479 = vmatpush1.msra.mxu0 0.0
    %480 = vmatprep.subr.mxu0 0.0
    %481 = vmatpush1.msra.mxu0 0.0
    %482 = vmatprep.subr.mxu0 0.0
    %483 = vmatpush1.msra.mxu0 0.0
    %484 = vmatprep.subr.mxu0 0.0
    %485 = vmatpush1.msra.mxu0 0.0
    %486 = vmatprep.subr.mxu0 0.0
    %487 = vmatpush1.msra.mxu0 0.0
    %488 = vmatprep.subr.mxu0 0.0
    %489 = vmatpush1.msra.mxu0 0.0
    %490 = vmatprep.subr.mxu0 0.0
    %491 = vmatpush1.msra.mxu0 0.0
    %492 = vmatprep.subr.mxu0 0.0
    %493 = vmatpush1.msra.mxu0 0.0
    %494 = vmatprep.subr.mxu0 0.0
    %495 = vmatpush1.msra.mxu0 0.0
    %496 = vmatprep.mubr.f32.mxu0 0.0
    %497 = vmatmul.mubr.f32.gmra.mrb[0].mxu0 %v392
    %v498 = vpop.f32.mrb[0].mxu0
    %v499 = vadd.f32 %v430, %v498
    %v500 = vpop.f32.mrb[0].mxu0
    %501 = vdwg.mxu0
    %502 = vst [vmem:[#allocation2] sm:$0xff] %v499
    // Predicated region
    $region30: #{server_net_forward.1} parent=1 // pred_check
      _
    $region31: #{server_net_forward.1} parent=1 // pred_check_branch
      %504 = sbr.rel (0) target = $region33
    $region32: #{server_net_forward.1} parent=1 // pred_region
      %s506 = ssub.s32 128, 128
      %507 = vsyncadd [#allocation3], %s506
      %s509 = sshll.u32 [#allocation2], 4
      %s510 = int_to_ptr.vmem [resolvable:$true] %s509
      %512 = dma.vmem_to_hbm [thread:$0]  %s510, 128, %s7, [#allocation3]
    $region33: #{server_net_forward.1} parent=1 // pred_fallthru
      _
    // Predicated region
    $region34: #{server_net_forward.1} parent=1 // pred_check
      _
    $region35: #{server_net_forward.1} parent=1 // pred_check_branch
      %514 = sbr.rel (0) target = $region37
    $region36: #{server_net_forward.1} parent=1 // pred_region
      %515 = dma.done [#allocation3], 128
    $region37: #{server_net_forward.1} parent=1 // pred_fallthru
      _
    %516 = vsyncpa [#allocation3], 1

</llo_original>
